<compile_context>
chip_gen: v7x
topology: tpu7x:2x2x1
jax: 0.10.0
libtpu: 0.0.40
codegen_flags: <defaults>
</compile_context>

<pallas_src>
import jax
import jax.numpy as jnp
from jax.experimental import pallas as pl
from jax.experimental.pallas import tpu as pltpu


def _round_up(x, m):
    return ((x + m - 1) // m) * m


def mlp_kernel(x_ref, w1t_ref, b1_ref, w2_ref, b2_ref, o_ref):
    # hT = sigmoid(W1^T @ x^T + b1), batch on lanes: (H, TILE_B)
    # dot_general contracts the last dim of both operands (a @ b.T pattern),
    # so no transpose is materialized.
    hT = jax.lax.dot_general(
        w1t_ref[...],                 # (H, D_in)
        x_ref[...],                   # (TILE_B, D_in)
        dimension_numbers=(((1,), (1,)), ((), ())),
        preferred_element_type=jnp.float32,
    )                                 # (H, TILE_B)
    hT = jax.nn.sigmoid(hT + b1_ref[...])          # b1: (H, 1) broadcasts over lanes

    # Second projection 128 -> 1 on the VPU (mul) + XLU (sublane reduce);
    # avoids an N=1 MXU pass.
    y = jnp.sum(hT * w2_ref[...], axis=0, keepdims=True)   # (1, TILE_B)

    o_ref[...] = jax.nn.sigmoid(y + b2_ref[0]).astype(o_ref.dtype)


def classification_forward(x, w1, b1, w2, b2, *, tile_b=512):
    """x: (B, D_in); w1: (D_in, 128); b1: (128,); w2: (128, 1); b2: (1,)."""
    B, D_in = x.shape
    H = w1.shape[1]

    # Tile the batch; keep the lane (last) dim of the output a multiple of 128
    # (or the full array dim).  Pad the batch if needed, slice back at the end.
    TILE_B = min(tile_b, _round_up(B, 128))
    B_pad = _round_up(B, TILE_B)
    num_tiles = B_pad // TILE_B
    if B_pad != B:
        x = jnp.pad(x, ((0, B_pad - B), (0, 0)))

    # TODO(synk): store weights pre-transposed at init time to skip this per-call transpose.
    w1t = w1.T                      # (H, D_in)
    b1c = b1.reshape(H, 1)          # column, broadcasts over lanes in-kernel
    w2c = w2.reshape(H, 1)          # column
    b2s = b2.reshape(1).astype(jnp.float32)   # scalar in SMEM

    itemsize = jnp.dtype(x.dtype).itemsize
    cost = pl.CostEstimate(
        flops=2 * B_pad * D_in * H + 2 * B_pad * H,
        transcendentals=B_pad * (H + 1),
        bytes_accessed=(B_pad * D_in * itemsize   # x
                        + (D_in * H + H + H + 1) * 4   # weights/biases
                        + B_pad * 4),                   # output
    )

    out = pl.pallas_call(
        mlp_kernel,
        out_shape=jax.ShapeDtypeStruct((1, B_pad), jnp.float32),
        grid_spec=pltpu.PrefetchScalarGridSpec(
            num_scalar_prefetch=0,
            grid=(num_tiles,),
            in_specs=[
                # x tile: pipelined / double-buffered over the batch grid axis.
                pl.BlockSpec((TILE_B, D_in), lambda i: (i, 0)),
                # Weights: whole-array VMEM resident across the grid.
                pl.BlockSpec(memory_space=pltpu.VMEM),   # w1t (H, D_in)
                pl.BlockSpec(memory_space=pltpu.VMEM),   # b1  (H, 1)
                pl.BlockSpec(memory_space=pltpu.VMEM),   # w2  (H, 1)
                # b2: scalar in SMEM (no padded VMEM tile / extra DMA buffer).
                pl.BlockSpec(memory_space=pltpu.MemorySpace.SMEM),
            ],
            # Lane-dense output slab: (1, TILE_B) blocks of a (1, B_pad) row.
            out_specs=pl.BlockSpec((1, TILE_B), lambda i: (0, i)),
        ),
        compiler_params=pltpu.CompilerParams(
            dimension_semantics=("parallel",),   # shard batch tiles across TCs (v7x)
        ),
        cost_estimate=cost,
    )(x, w1t, b1c, w2c, b2s)

    # squeeze(-1) of the logical (B, 1): take the valid lane-dense row -> (B,)
    return out[0, :B]


def init_params(key, input_size, hidden=128, output_size=1):
    """Deterministic init mimicking PyTorch nn.Linear default (U(-1/sqrt(fan_in), +))."""
    k1, k2, k3, k4 = jax.random.split(key, 4)
    bound1 = 1.0 / jnp.sqrt(jnp.float32(input_size))
    bound2 = 1.0 / jnp.sqrt(jnp.float32(hidden))
    # Stored already transposed relative to PyTorch (weight.T), i.e. (in, out).
    w1 = jax.random.uniform(k1, (input_size, hidden), jnp.float32, -bound1, bound1)
    b1 = jax.random.uniform(k2, (hidden,), jnp.float32, -bound1, bound1)
    w2 = jax.random.uniform(k3, (hidden, output_size), jnp.float32, -bound2, bound2)
    b2 = jax.random.uniform(k4, (output_size,), jnp.float32, -bound2, bound2)
    return w1, b1, w2, b2


if __name__ == "__main__":
    key = jax.random.PRNGKey(0)
    k_x, k_p = jax.random.split(key)

    batch = 8
    input_size = 32   # stand-in for len(X_train_data[0])
    output_size = 1

    x = jax.random.normal(k_x, (batch, input_size), jnp.float32)
    w1, b1, w2, b2 = init_params(k_p, input_size, 128, output_size)

    y = classification_forward(x, w1, b1, w2, b2)
    y = jax.block_until_ready(y)

    # Pure-JAX reference check.
    h_ref = jax.nn.sigmoid(x @ w1 + b1)
    y_ref = jax.nn.sigmoid(h_ref @ w2 + b2)[:, 0]
    assert y.shape == (batch,)
    assert jnp.allclose(y, y_ref, atol=5e-5, rtol=5e-5), (
        float(jnp.max(jnp.abs(y - y_ref)))
    )

    print("KERNEL_OK")
</pallas_src>

<mosaic_0001>
module attributes {stable_mosaic.version = 11 : i64} {
  func.func @mlp_kernel(%arg0: i32, %arg1: memref<128x32xf32, #tpu.memory_space<vmem>>, %arg2: memref<128x32xf32, #tpu.memory_space<vmem>>, %arg3: memref<128x1xf32, #tpu.memory_space<vmem>>, %arg4: memref<128x1xf32, #tpu.memory_space<vmem>>, %arg5: memref<1xf32, #tpu.memory_space<smem>>, %arg6: memref<1x128xf32, #tpu.memory_space<vmem>>) attributes {dimension_semantics = [#tpu.dimension_semantics<parallel>], iteration_bounds = array<i64: 1>, scalar_prefetch = 0 : i64, scratch_operands = 0 : i64, tpu.core_type = #tpu.core_type<tc>, window_params = [{transform_indices = @transform_0, window_bounds = array<i64: 128, 32>}, {pipeline_mode = #tpu.pipeline_mode<synchronous>, transform_indices = @transform_1, window_bounds = array<i64: 128, 32>}, {pipeline_mode = #tpu.pipeline_mode<synchronous>, transform_indices = @transform_2, window_bounds = array<i64: 128, 1>}, {pipeline_mode = #tpu.pipeline_mode<synchronous>, transform_indices = @transform_3, window_bounds = array<i64: 128, 1>}, {transform_indices = @transform_4, window_bounds = array<i64: 1>}, {transform_indices = @transform_5, window_bounds = array<i64: 1, 128>}]} {
    %c0 = arith.constant 0 : index
    %c0_0 = arith.constant 0 : index
    %0 = vector.load %arg2[%c0, %c0_0] : memref<128x32xf32, #tpu.memory_space<vmem>>, vector<128x32xf32>
    %c0_1 = arith.constant 0 : index
    %c0_2 = arith.constant 0 : index
    %1 = vector.load %arg1[%c0_1, %c0_2] : memref<128x32xf32, #tpu.memory_space<vmem>>, vector<128x32xf32>
    %cst = arith.constant dense<0.000000e+00> : vector<128x128xf32>
    %2 = tpu.matmul %0, %1, %cst {dimension_numbers = #tpu.dot_dimension_numbers<[1], [1], [0], [0], [0, 0, 1, 0], [], []>} : vector<128x32xf32>, vector<128x32xf32>, vector<128x128xf32> -> vector<128x128xf32>
    %c0_3 = arith.constant 0 : index
    %c0_4 = arith.constant 0 : index
    %3 = vector.load %arg3[%c0_3, %c0_4] : memref<128x1xf32, #tpu.memory_space<vmem>>, vector<128x1xf32>
    %4 = vector.broadcast %3 : vector<128x1xf32> to vector<128x128xf32>
    %5 = arith.addf %2, %4 : vector<128x128xf32>
    %6 = arith.negf %5 : vector<128x128xf32>
    %7 = math.exp %6 : vector<128x128xf32>
    %cst_5 = arith.constant 1.000000e+00 : f32
    %8 = vector.broadcast %cst_5 : f32 to vector<128x128xf32>
    %9 = arith.addf %8, %7 : vector<128x128xf32>
    %10 = arith.divf %8, %9 : vector<128x128xf32>
    %c0_6 = arith.constant 0 : index
    %c0_7 = arith.constant 0 : index
    %11 = vector.load %arg4[%c0_6, %c0_7] : memref<128x1xf32, #tpu.memory_space<vmem>>, vector<128x1xf32>
    %12 = vector.broadcast %11 : vector<128x1xf32> to vector<128x128xf32>
    %13 = arith.mulf %10, %12 : vector<128x128xf32>
    %cst_8 = arith.constant dense<0.000000e+00> : vector<128xf32>
    %14 = vector.multi_reduction <add>, %13, %cst_8 [0] : vector<128x128xf32> to vector<128xf32>
    %15 = vector.shape_cast %14 : vector<128xf32> to vector<1x128xf32>
    %c0_9 = arith.constant 0 : index
    %16 = memref.load %arg5[%c0_9] : memref<1xf32, #tpu.memory_space<smem>>
    %17 = vector.broadcast %16 : f32 to vector<1x128xf32>
    %18 = arith.addf %15, %17 : vector<1x128xf32>
    %19 = arith.negf %18 : vector<1x128xf32>
    %20 = math.exp %19 : vector<1x128xf32>
    %cst_10 = arith.constant 1.000000e+00 : f32
    %21 = vector.broadcast %cst_10 : f32 to vector<1x128xf32>
    %22 = arith.addf %21, %20 : vector<1x128xf32>
    %23 = arith.divf %21, %22 : vector<1x128xf32>
    %c0_11 = arith.constant 0 : index
    %c0_12 = arith.constant 0 : index
    %24 = vector.load %arg6[%c0_11, %c0_12] : memref<1x128xf32, #tpu.memory_space<vmem>>, vector<1x128xf32>
    tpu.vector_store %arg6[%c0_11, %c0_12], %23 {strides = array<i32>} : memref<1x128xf32, #tpu.memory_space<vmem>>, vector<1x128xf32>,
    return
  }
  func.func @transform_0(%arg0: i32) -> (i32, i32) {
    %c0_i32 = arith.constant 0 : i32
    %c0_i32_0 = arith.constant 0 : i32
    return %arg0, %c0_i32 : i32, i32
  }
  func.func @transform_1(%arg0: i32) -> (i32, i32) {
    %c0_i32 = arith.constant 0 : i32
    %c0_i32_0 = arith.constant 0 : i32
    %c0_i32_1 = arith.constant 0 : i32
    return %c0_i32, %c0_i32_0 : i32, i32
  }
  func.func @transform_2(%arg0: i32) -> (i32, i32) {
    %c0_i32 = arith.constant 0 : i32
    %c0_i32_0 = arith.constant 0 : i32
    %c0_i32_1 = arith.constant 0 : i32
    return %c0_i32, %c0_i32_0 : i32, i32
  }
  func.func @transform_3(%arg0: i32) -> (i32, i32) {
    %c0_i32 = arith.constant 0 : i32
    %c0_i32_0 = arith.constant 0 : i32
    %c0_i32_1 = arith.constant 0 : i32
    return %c0_i32, %c0_i32_0 : i32, i32
  }
  func.func @transform_4(%arg0: i32) -> i32 {
    %c0_i32 = arith.constant 0 : i32
    %c0_i32_0 = arith.constant 0 : i32
    return %c0_i32 : i32
  }
  func.func @transform_5(%arg0: i32) -> (i32, i32) {
    %c0_i32 = arith.constant 0 : i32
    %c0_i32_0 = arith.constant 0 : i32
    return %c0_i32, %arg0 : i32, i32
  }
}

</mosaic_0001>

<llo_original>
// kernel: tpu_custom_call.1
$region0: #{tpu_custom_call.1}
  #allocation0 [shape = 'u32[]', space=smem, size = 0x4, offset = 0x4, fixed_abs, tag = 'smem constant byte address 0x4 - core index']
  #allocation1 [shape = 'u32[144,128]{1,0:T(1,128)}', space=vmem, size = 0x12000, scoped, tag = 'internal scratch']
  #allocation2 [shape = 'f32[1]{0:T(128)S(6)}', space=smem, size = 0x200, scoped, tag = 'scoped memory for tpu_custom_call.1']
  %s0 = inlined_call_operand.vmem [shape: f32[128,32], index: 0, kind: input, shape index: {}]
  %s1 = inlined_call_operand.vmem [shape: f32[128,32], index: 1, kind: input, shape index: {}]
  %s2 = inlined_call_operand.vmem [shape: f32[128,1], index: 2, kind: input, shape index: {}]
  %s3 = inlined_call_operand.vmem [shape: f32[128,1], index: 3, kind: input, shape index: {}]
  %s4 = inlined_call_operand.<no memory space> [shape: f32[1], index: 4, kind: input, shape index: {}]
  %s5 = inlined_call_operand.hbm [shape: f32[1,128], index: 5, kind: output, shape index: {}]
  %s6 = sld [smem:[#allocation0]]
  $region30: #{tpu_custom_call.1} parent=0
    _
  %s8 = ssub.s32 1, %s6
  %s9 = scalar_select 0, %s8, %s6
  %10 = sst [smem:[#allocation2]] %s4
  $region1: #{tpu_custom_call.1} parent=0
    #allocation3 [shape = 'u8[512]{0}', space=vmem, size = 0x400, scoped, tag = 'output window, operand 0, single buffered']
    #allocation4 [shape = 's32[1]{0}', space=sflag, size = 0x4, scoped, tag = 'scoped memory for tpu_custom_call.1']
    %11 = vsyncpa [#allocation4], 0
    // Predicated region
    $region2: #{tpu_custom_call.1} parent=1 // pred_check
      _
    $region3: #{tpu_custom_call.1} parent=1 // pred_check_branch
      %13 = sbr.rel (0) target = $region5
    $region4: #{tpu_custom_call.1} parent=1 // pred_region
      _
    $region5: #{tpu_custom_call.1} parent=1 // pred_fallthru
      _
    // Predicated region
    $region6: #{tpu_custom_call.1} parent=1 // pred_check
      _
    $region7: #{tpu_custom_call.1} parent=1 // pred_check_branch
      %15 = sbr.rel (0) target = $region9
    $region8: #{tpu_custom_call.1} parent=1 // pred_region
      _
    $region9: #{tpu_custom_call.1} parent=1 // pred_fallthru
      _
    // Predicated region
    $region10: #{tpu_custom_call.1} parent=1 // pred_check
      _
    $region11: #{tpu_custom_call.1} parent=1 // pred_check_branch
      %17 = sbr.rel (0) target = $region13
    $region12: #{tpu_custom_call.1} parent=1 // pred_region
      _
    $region13: #{tpu_custom_call.1} parent=1 // pred_fallthru
      _
    // Predicated region
    $region14: #{tpu_custom_call.1} parent=1 // pred_check
      _
    $region15: #{tpu_custom_call.1} parent=1 // pred_check_branch
      %19 = sbr.rel (0) target = $region17
    $region16: #{tpu_custom_call.1} parent=1 // pred_region
      _
    $region17: #{tpu_custom_call.1} parent=1 // pred_fallthru
      _
    // Predicated region
    $region18: #{tpu_custom_call.1} parent=1 // pred_check
      _
    $region19: #{tpu_custom_call.1} parent=1 // pred_check_branch
      %21 = sbr.rel (0) target = $region21
    $region20: #{tpu_custom_call.1} parent=1 // pred_region
      _
    $region21: #{tpu_custom_call.1} parent=1 // pred_fallthru
      _
    %v22 = vld [vmem:[%s1] sm:$0xff]
    %v23 = vld [vmem:[%s1 + $0x8] sm:$0xff]
    %v24 = vld [vmem:[%s1 + $0x10] sm:$0xff]
    %v25 = vld [vmem:[%s1 + $0x18] sm:$0xff]
    %v26 = vld [vmem:[%s1 + $0x20] sm:$0xff]
    %v27 = vld [vmem:[%s1 + $0x28] sm:$0xff]
    %v28 = vld [vmem:[%s1 + $0x30] sm:$0xff]
    %v29 = vld [vmem:[%s1 + $0x38] sm:$0xff]
    %v30 = vld [vmem:[%s1 + $0x40] sm:$0xff]
    %v31 = vld [vmem:[%s1 + $0x48] sm:$0xff]
    %v32 = vld [vmem:[%s1 + $0x50] sm:$0xff]
    %v33 = vld [vmem:[%s1 + $0x58] sm:$0xff]
    %v34 = vld [vmem:[%s1 + $0x60] sm:$0xff]
    %v35 = vld [vmem:[%s1 + $0x68] sm:$0xff]
    %v36 = vld [vmem:[%s1 + $0x70] sm:$0xff]
    %v37 = vld [vmem:[%s1 + $0x78] sm:$0xff]
    %v38 = vld [vmem:[%s0] sm:$0xff]
    %v39 = vld [vmem:[%s0 + $0x8] sm:$0xff]
    %v40 = vld [vmem:[%s0 + $0x10] sm:$0xff]
    %v41 = vld [vmem:[%s0 + $0x18] sm:$0xff]
    %v42 = vld [vmem:[%s0 + $0x20] sm:$0xff]
    %v43 = vld [vmem:[%s0 + $0x28] sm:$0xff]
    %v44 = vld [vmem:[%s0 + $0x30] sm:$0xff]
    %v45 = vld [vmem:[%s0 + $0x38] sm:$0xff]
    %v46 = vld [vmem:[%s0 + $0x40] sm:$0xff]
    %v47 = vld [vmem:[%s0 + $0x48] sm:$0xff]
    %v48 = vld [vmem:[%s0 + $0x50] sm:$0xff]
    %v49 = vld [vmem:[%s0 + $0x58] sm:$0xff]
    %v50 = vld [vmem:[%s0 + $0x60] sm:$0xff]
    %v51 = vld [vmem:[%s0 + $0x68] sm:$0xff]
    %v52 = vld [vmem:[%s0 + $0x70] sm:$0xff]
    %v53 = vld [vmem:[%s0 + $0x78] sm:$0xff]
    %v54 = vld [vmem:[%s2] sm:$0xff]
    %v55 = vld [vmem:[%s2 + $0x8] sm:$0xff]
    %v56 = vld [vmem:[%s2 + $0x10] sm:$0xff]
    %v57 = vld [vmem:[%s2 + $0x18] sm:$0xff]
    %v58 = vld [vmem:[%s2 + $0x20] sm:$0xff]
    %v59 = vld [vmem:[%s2 + $0x28] sm:$0xff]
    %v60 = vld [vmem:[%s2 + $0x30] sm:$0xff]
    %v61 = vld [vmem:[%s2 + $0x38] sm:$0xff]
    %v62 = vld [vmem:[%s2 + $0x40] sm:$0xff]
    %v63 = vld [vmem:[%s2 + $0x48] sm:$0xff]
    %v64 = vld [vmem:[%s2 + $0x50] sm:$0xff]
    %v65 = vld [vmem:[%s2 + $0x58] sm:$0xff]
    %v66 = vld [vmem:[%s2 + $0x60] sm:$0xff]
    %v67 = vld [vmem:[%s2 + $0x68] sm:$0xff]
    %v68 = vld [vmem:[%s2 + $0x70] sm:$0xff]
    %v69 = vld [vmem:[%s2 + $0x78] sm:$0xff]
    %71 = vset.pattern.permute.xlu0 0
    %72 = vperm.xlu0 %71, %v54
    %v73 = vpop.permute.xlu0 %72
    %76 = vset.pattern.permute.xlu0 0
    %77 = vperm.xlu0 %76, %v55
    %v78 = vpop.permute.xlu0 %77
    %81 = vset.pattern.permute.xlu0 0
    %82 = vperm.xlu0 %81, %v56
    %v83 = vpop.permute.xlu0 %82
    %86 = vset.pattern.permute.xlu0 0
    %87 = vperm.xlu0 %86, %v57
    %v88 = vpop.permute.xlu0 %87
    %91 = vset.pattern.permute.xlu0 0
    %92 = vperm.xlu0 %91, %v58
    %v93 = vpop.permute.xlu0 %92
    %96 = vset.pattern.permute.xlu0 0
    %97 = vperm.xlu0 %96, %v59
    %v98 = vpop.permute.xlu0 %97
    %101 = vset.pattern.permute.xlu0 0
    %102 = vperm.xlu0 %101, %v60
    %v103 = vpop.permute.xlu0 %102
    %106 = vset.pattern.permute.xlu0 0
    %107 = vperm.xlu0 %106, %v61
    %v108 = vpop.permute.xlu0 %107
    %111 = vset.pattern.permute.xlu0 0
    %112 = vperm.xlu0 %111, %v62
    %v113 = vpop.permute.xlu0 %112
    %116 = vset.pattern.permute.xlu0 0
    %117 = vperm.xlu0 %116, %v63
    %v118 = vpop.permute.xlu0 %117
    %121 = vset.pattern.permute.xlu0 0
    %122 = vperm.xlu0 %121, %v64
    %v123 = vpop.permute.xlu0 %122
    %126 = vset.pattern.permute.xlu0 0
    %127 = vperm.xlu0 %126, %v65
    %v128 = vpop.permute.xlu0 %127
    %131 = vset.pattern.permute.xlu0 0
    %132 = vperm.xlu0 %131, %v66
    %v133 = vpop.permute.xlu0 %132
    %136 = vset.pattern.permute.xlu0 0
    %137 = vperm.xlu0 %136, %v67
    %v138 = vpop.permute.xlu0 %137
    %141 = vset.pattern.permute.xlu0 0
    %142 = vperm.xlu0 %141, %v68
    %v143 = vpop.permute.xlu0 %142
    %146 = vset.pattern.permute.xlu0 0
    %147 = vperm.xlu0 %146, %v69
    %v148 = vpop.permute.xlu0 %147
    %vm150 = vcmask 261120
    %v152 = vsel %vm150, %v22, 0
    %v155 = vsel %vm150, %v23, 0
    %v158 = vsel %vm150, %v24, 0
    %v161 = vsel %vm150, %v25, 0
    %v164 = vsel %vm150, %v26, 0
    %v167 = vsel %vm150, %v27, 0
    %v170 = vsel %vm150, %v28, 0
    %v173 = vsel %vm150, %v29, 0
    %v176 = vsel %vm150, %v30, 0
    %v179 = vsel %vm150, %v31, 0
    %v182 = vsel %vm150, %v32, 0
    %v185 = vsel %vm150, %v33, 0
    %v188 = vsel %vm150, %v34, 0
    %v191 = vsel %vm150, %v35, 0
    %v194 = vsel %vm150, %v36, 0
    %v197 = vsel %vm150, %v37, 0
    %v200 = vsel %vm150, %v38, 0
    %v203 = vsel %vm150, %v39, 0
    %v206 = vsel %vm150, %v40, 0
    %v209 = vsel %vm150, %v41, 0
    %v212 = vsel %vm150, %v42, 0
    %v215 = vsel %vm150, %v43, 0
    %v218 = vsel %vm150, %v44, 0
    %v221 = vsel %vm150, %v45, 0
    %v224 = vsel %vm150, %v46, 0
    %v227 = vsel %vm150, %v47, 0
    %v230 = vsel %vm150, %v48, 0
    %v233 = vsel %vm150, %v49, 0
    %v236 = vsel %vm150, %v50, 0
    %v239 = vsel %vm150, %v51, 0
    %v242 = vsel %vm150, %v52, 0
    %v245 = vsel %vm150, %v53, 0
    %247 = vmatprep.subr.mxu0 0.0
    %248 = vmatpush1.xpose.msra.mxu0 %v200
    %249 = vmatprep.subr.mxu0 0.0
    %250 = vmatpush1.xpose.msra.mxu0 %v203
    %251 = vmatprep.subr.mxu0 0.0
    %252 = vmatpush1.xpose.msra.mxu0 %v206
    %253 = vmatprep.subr.mxu0 0.0
    %254 = vmatpush1.xpose.msra.mxu0 %v209
    %255 = vmatprep.subr.mxu0 0.0
    %256 = vmatpush1.xpose.msra.mxu0 %v212
    %257 = vmatprep.subr.mxu0 0.0
    %258 = vmatpush1.xpose.msra.mxu0 %v215
    %259 = vmatprep.subr.mxu0 0.0
    %260 = vmatpush1.xpose.msra.mxu0 %v218
    %261 = vmatprep.subr.mxu0 0.0
    %262 = vmatpush1.xpose.msra.mxu0 %v221
    %263 = vmatprep.subr.mxu0 0.0
    %264 = vmatpush1.xpose.msra.mxu0 %v224
    %265 = vmatprep.subr.mxu0 0.0
    %266 = vmatpush1.xpose.msra.mxu0 %v227
    %267 = vmatprep.subr.mxu0 0.0
    %268 = vmatpush1.xpose.msra.mxu0 %v230
    %269 = vmatprep.subr.mxu0 0.0
    %270 = vmatpush1.xpose.msra.mxu0 %v233
    %271 = vmatprep.subr.mxu0 0.0
    %272 = vmatpush1.xpose.msra.mxu0 %v236
    %273 = vmatprep.subr.mxu0 0.0
    %274 = vmatpush1.xpose.msra.mxu0 %v239
    %275 = vmatprep.subr.mxu0 0.0
    %276 = vmatpush1.xpose.msra.mxu0 %v242
    %277 = vmatprep.subr.mxu0 0.0
    %278 = vmatpush1.xpose.msra.mxu0 %v245
    %279 = vmatprep.subr.mxu0 0.0
    %280 = vmatpush1.xpose.msra.mxu0 0.0
    %281 = vmatprep.subr.mxu0 0.0
    %282 = vmatpush1.xpose.msra.mxu0 0.0
    %283 = vmatprep.subr.mxu0 0.0
    %284 = vmatpush1.xpose.msra.mxu0 0.0
    %285 = vmatprep.subr.mxu0 0.0
    %286 = vmatpush1.xpose.msra.mxu0 0.0
    %287 = vmatprep.subr.mxu0 0.0
    %288 = vmatpush1.xpose.msra.mxu0 0.0
    %289 = vmatprep.subr.mxu0 0.0
    %290 = vmatpush1.xpose.msra.mxu0 0.0
    %291 = vmatprep.subr.mxu0 0.0
    %292 = vmatpush1.xpose.msra.mxu0 0.0
    %293 = vmatprep.subr.mxu0 0.0
    %294 = vmatpush1.xpose.msra.mxu0 0.0
    %295 = vmatprep.subr.mxu0 0.0
    %296 = vmatpush1.xpose.msra.mxu0 0.0
    %297 = vmatprep.subr.mxu0 0.0
    %298 = vmatpush1.xpose.msra.mxu0 0.0
    %299 = vmatprep.subr.mxu0 0.0
    %300 = vmatpush1.xpose.msra.mxu0 0.0
    %301 = vmatprep.subr.mxu0 0.0
    %302 = vmatpush1.xpose.msra.mxu0 0.0
    %303 = vmatprep.subr.mxu0 0.0
    %304 = vmatpush1.xpose.msra.mxu0 0.0
    %305 = vmatprep.subr.mxu0 0.0
    %306 = vmatpush1.xpose.msra.mxu0 0.0
    %307 = vmatprep.subr.mxu0 0.0
    %308 = vmatpush1.xpose.msra.mxu0 0.0
    %309 = vmatprep.subr.mxu0 0.0
    %310 = vmatpush1.xpose.msra.mxu0 0.0
    %311 = vmatprep.mubr.f32.mxu0 0.0
    %312 = vmatmul.mubr.f32.gmra.mrb[0].mxu0 %v152
    %v313 = vpop.f32.mrb[0].mxu0
    %v314 = vadd.f32 %v73, %v313
    %v315 = vpop.f32.mrb[0].mxu0
    %316 = vmatprep.mubr.f32.mxu0 0.0
    %317 = vmatmul.mubr.f32.gmra.mrb[0].mxu0 %v155
    %v318 = vpop.f32.mrb[0].mxu0
    %v319 = vadd.f32 %v78, %v318
    %v320 = vpop.f32.mrb[0].mxu0
    %321 = vmatprep.mubr.f32.mxu0 0.0
    %322 = vmatmul.mubr.f32.gmra.mrb[0].mxu0 %v158
    %v323 = vpop.f32.mrb[0].mxu0
    %v324 = vadd.f32 %v83, %v323
    %v325 = vpop.f32.mrb[0].mxu0
    %326 = vmatprep.mubr.f32.mxu0 0.0
    %327 = vmatmul.mubr.f32.gmra.mrb[0].mxu0 %v161
    %v328 = vpop.f32.mrb[0].mxu0
    %v329 = vadd.f32 %v88, %v328
    %v330 = vpop.f32.mrb[0].mxu0
    %331 = vmatprep.mubr.f32.mxu0 0.0
    %332 = vmatmul.mubr.f32.gmra.mrb[0].mxu0 %v164
    %v333 = vpop.f32.mrb[0].mxu0
    %v334 = vadd.f32 %v93, %v333
    %v335 = vpop.f32.mrb[0].mxu0
    %336 = vmatprep.mubr.f32.mxu0 0.0
    %337 = vmatmul.mubr.f32.gmra.mrb[0].mxu0 %v167
    %v338 = vpop.f32.mrb[0].mxu0
    %v339 = vadd.f32 %v98, %v338
    %v340 = vpop.f32.mrb[0].mxu0
    %341 = vmatprep.mubr.f32.mxu0 0.0
    %342 = vmatmul.mubr.f32.gmra.mrb[0].mxu0 %v170
    %v343 = vpop.f32.mrb[0].mxu0
    %v344 = vadd.f32 %v103, %v343
    %v345 = vpop.f32.mrb[0].mxu0
    %346 = vmatprep.mubr.f32.mxu0 0.0
    %347 = vmatmul.mubr.f32.gmra.mrb[0].mxu0 %v173
    %v348 = vpop.f32.mrb[0].mxu0
    %v349 = vadd.f32 %v108, %v348
    %v350 = vpop.f32.mrb[0].mxu0
    %351 = vmatprep.mubr.f32.mxu0 0.0
    %352 = vmatmul.mubr.f32.gmra.mrb[0].mxu0 %v176
    %v353 = vpop.f32.mrb[0].mxu0
    %v354 = vadd.f32 %v113, %v353
    %v355 = vpop.f32.mrb[0].mxu0
    %356 = vmatprep.mubr.f32.mxu0 0.0
    %357 = vmatmul.mubr.f32.gmra.mrb[0].mxu0 %v179
    %v358 = vpop.f32.mrb[0].mxu0
    %v359 = vadd.f32 %v118, %v358
    %v360 = vpop.f32.mrb[0].mxu0
    %361 = vmatprep.mubr.f32.mxu0 0.0
    %362 = vmatmul.mubr.f32.gmra.mrb[0].mxu0 %v182
    %v363 = vpop.f32.mrb[0].mxu0
    %v364 = vadd.f32 %v123, %v363
    %v365 = vpop.f32.mrb[0].mxu0
    %366 = vmatprep.mubr.f32.mxu0 0.0
    %367 = vmatmul.mubr.f32.gmra.mrb[0].mxu0 %v185
    %v368 = vpop.f32.mrb[0].mxu0
    %v369 = vadd.f32 %v128, %v368
    %v370 = vpop.f32.mrb[0].mxu0
    %371 = vmatprep.mubr.f32.mxu0 0.0
    %372 = vmatmul.mubr.f32.gmra.mrb[0].mxu0 %v188
    %v373 = vpop.f32.mrb[0].mxu0
    %v374 = vadd.f32 %v133, %v373
    %v375 = vpop.f32.mrb[0].mxu0
    %376 = vmatprep.mubr.f32.mxu0 0.0
    %377 = vmatmul.mubr.f32.gmra.mrb[0].mxu0 %v191
    %v378 = vpop.f32.mrb[0].mxu0
    %v379 = vadd.f32 %v138, %v378
    %v380 = vpop.f32.mrb[0].mxu0
    %381 = vmatprep.mubr.f32.mxu0 0.0
    %382 = vmatmul.mubr.f32.gmra.mrb[0].mxu0 %v194
    %v383 = vpop.f32.mrb[0].mxu0
    %v384 = vadd.f32 %v143, %v383
    %v385 = vpop.f32.mrb[0].mxu0
    %386 = vmatprep.mubr.f32.mxu0 0.0
    %387 = vmatmul.mubr.f32.gmra.mrb[0].mxu0 %v197
    %v388 = vpop.f32.mrb[0].mxu0
    %v389 = vadd.f32 %v148, %v388
    %v390 = vpop.f32.mrb[0].mxu0
    %391 = vdwg.mxu0
    %v392 = vxor.u32 %v314, 2147483648
    %v393 = vxor.u32 %v319, 2147483648
    %v394 = vxor.u32 %v324, 2147483648
    %v395 = vxor.u32 %v329, 2147483648
    %v396 = vxor.u32 %v334, 2147483648
    %v397 = vxor.u32 %v339, 2147483648
    %v398 = vxor.u32 %v344, 2147483648
    %v399 = vxor.u32 %v349, 2147483648
    %v400 = vxor.u32 %v354, 2147483648
    %v401 = vxor.u32 %v359, 2147483648
    %v402 = vxor.u32 %v364, 2147483648
    %v403 = vxor.u32 %v369, 2147483648
    %v404 = vxor.u32 %v374, 2147483648
    %v405 = vxor.u32 %v379, 2147483648
    %v406 = vxor.u32 %v384, 2147483648
    %v407 = vxor.u32 %v389, 2147483648
    %v408 = vmul.f32 %v392, 1.442695
    %v409 = vpow.pop %v408
    %v410 = vmul.f32 %v393, 1.442695
    %v411 = vpow.pop %v410
    %v412 = vmul.f32 %v394, 1.442695
    %v413 = vpow.pop %v412
    %v414 = vmul.f32 %v395, 1.442695
    %v415 = vpow.pop %v414
    %v416 = vmul.f32 %v396, 1.442695
    %v417 = vpow.pop %v416
    %v418 = vmul.f32 %v397, 1.442695
    %v419 = vpow.pop %v418
    %v420 = vmul.f32 %v398, 1.442695
    %v421 = vpow.pop %v420
    %v422 = vmul.f32 %v399, 1.442695
    %v423 = vpow.pop %v422
    %v424 = vmul.f32 %v400, 1.442695
    %v425 = vpow.pop %v424
    %v426 = vmul.f32 %v401, 1.442695
    %v427 = vpow.pop %v426
    %v428 = vmul.f32 %v402, 1.442695
    %v429 = vpow.pop %v428
    %v430 = vmul.f32 %v403, 1.442695
    %v431 = vpow.pop %v430
    %v432 = vmul.f32 %v404, 1.442695
    %v433 = vpow.pop %v432
    %v434 = vmul.f32 %v405, 1.442695
    %v435 = vpow.pop %v434
    %v436 = vmul.f32 %v406, 1.442695
    %v437 = vpow.pop %v436
    %v438 = vmul.f32 %v407, 1.442695
    %v439 = vpow.pop %v438
    %v440 = vadd.f32 %v409, 1.0
    %v441 = vadd.f32 %v411, 1.0
    %v442 = vadd.f32 %v413, 1.0
    %v443 = vadd.f32 %v415, 1.0
    %v444 = vadd.f32 %v417, 1.0
    %v445 = vadd.f32 %v419, 1.0
    %v446 = vadd.f32 %v421, 1.0
    %v447 = vadd.f32 %v423, 1.0
    %v448 = vadd.f32 %v425, 1.0
    %v449 = vadd.f32 %v427, 1.0
    %v450 = vadd.f32 %v429, 1.0
    %v451 = vadd.f32 %v431, 1.0
    %v452 = vadd.f32 %v433, 1.0
    %v453 = vadd.f32 %v435, 1.0
    %v454 = vadd.f32 %v437, 1.0
    %v455 = vadd.f32 %v439, 1.0
    %v456 = vrcp.pop %v440
    %v457 = vmul.f32 1.0, %v456
    %v458 = vrcp.pop %v441
    %v459 = vmul.f32 1.0, %v458
    %v460 = vrcp.pop %v442
    %v461 = vmul.f32 1.0, %v460
    %v462 = vrcp.pop %v443
    %v463 = vmul.f32 1.0, %v462
    %v464 = vrcp.pop %v444
    %v465 = vmul.f32 1.0, %v464
    %v466 = vrcp.pop %v445
    %v467 = vmul.f32 1.0, %v466
    %v468 = vrcp.pop %v446
    %v469 = vmul.f32 1.0, %v468
    %v470 = vrcp.pop %v447
    %v471 = vmul.f32 1.0, %v470
    %v472 = vrcp.pop %v448
    %v473 = vmul.f32 1.0, %v472
    %v474 = vrcp.pop %v449
    %v475 = vmul.f32 1.0, %v474
    %v476 = vrcp.pop %v450
    %v477 = vmul.f32 1.0, %v476
    %v478 = vrcp.pop %v451
    %v479 = vmul.f32 1.0, %v478
    %v480 = vrcp.pop %v452
    %v481 = vmul.f32 1.0, %v480
    %v482 = vrcp.pop %v453
    %v483 = vmul.f32 1.0, %v482
    %v484 = vrcp.pop %v454
    %v485 = vmul.f32 1.0, %v484
    %v486 = vrcp.pop %v455
    %v487 = vmul.f32 1.0, %v486
    %v488 = vld [vmem:[%s3] sm:$0xff]
    %v489 = vld [vmem:[%s3 + $0x8] sm:$0xff]
    %v490 = vld [vmem:[%s3 + $0x10] sm:$0xff]
    %v491 = vld [vmem:[%s3 + $0x18] sm:$0xff]
    %v492 = vld [vmem:[%s3 + $0x20] sm:$0xff]
    %v493 = vld [vmem:[%s3 + $0x28] sm:$0xff]
    %v494 = vld [vmem:[%s3 + $0x30] sm:$0xff]
    %v495 = vld [vmem:[%s3 + $0x38] sm:$0xff]
    %v496 = vld [vmem:[%s3 + $0x40] sm:$0xff]
    %v497 = vld [vmem:[%s3 + $0x48] sm:$0xff]
    %v498 = vld [vmem:[%s3 + $0x50] sm:$0xff]
    %v499 = vld [vmem:[%s3 + $0x58] sm:$0xff]
    %v500 = vld [vmem:[%s3 + $0x60] sm:$0xff]
    %v501 = vld [vmem:[%s3 + $0x68] sm:$0xff]
    %v502 = vld [vmem:[%s3 + $0x70] sm:$0xff]
    %v503 = vld [vmem:[%s3 + $0x78] sm:$0xff]
    %505 = vset.pattern.permute.xlu0 0
    %506 = vperm.xlu0 %505, %v488
    %v507 = vpop.permute.xlu0 %506
    %510 = vset.pattern.permute.xlu0 0
    %511 = vperm.xlu0 %510, %v489
    %v512 = vpop.permute.xlu0 %511
    %515 = vset.pattern.permute.xlu0 0
    %516 = vperm.xlu0 %515, %v490
    %v517 = vpop.permute.xlu0 %516
    %520 = vset.pattern.permute.xlu0 0
    %521 = vperm.xlu0 %520, %v491
    %v522 = vpop.permute.xlu0 %521
    %525 = vset.pattern.permute.xlu0 0
    %526 = vperm.xlu0 %525, %v492
    %v527 = vpop.permute.xlu0 %526
    %530 = vset.pattern.permute.xlu0 0
    %531 = vperm.xlu0 %530, %v493
    %v532 = vpop.permute.xlu0 %531
    %535 = vset.pattern.permute.xlu0 0
    %536 = vperm.xlu0 %535, %v494
    %v537 = vpop.permute.xlu0 %536
    %540 = vset.pattern.permute.xlu0 0
    %541 = vperm.xlu0 %540, %v495
    %v542 = vpop.permute.xlu0 %541
    %545 = vset.pattern.permute.xlu0 0
    %546 = vperm.xlu0 %545, %v496
    %v547 = vpop.permute.xlu0 %546
    %550 = vset.pattern.permute.xlu0 0
    %551 = vperm.xlu0 %550, %v497
    %v552 = vpop.permute.xlu0 %551
    %555 = vset.pattern.permute.xlu0 0
    %556 = vperm.xlu0 %555, %v498
    %v557 = vpop.permute.xlu0 %556
    %560 = vset.pattern.permute.xlu0 0
    %561 = vperm.xlu0 %560, %v499
    %v562 = vpop.permute.xlu0 %561
    %565 = vset.pattern.permute.xlu0 0
    %566 = vperm.xlu0 %565, %v500
    %v567 = vpop.permute.xlu0 %566
    %570 = vset.pattern.permute.xlu0 0
    %571 = vperm.xlu0 %570, %v501
    %v572 = vpop.permute.xlu0 %571
    %575 = vset.pattern.permute.xlu0 0
    %576 = vperm.xlu0 %575, %v502
    %v577 = vpop.permute.xlu0 %576
    %580 = vset.pattern.permute.xlu0 0
    %581 = vperm.xlu0 %580, %v503
    %v582 = vpop.permute.xlu0 %581
    %v584 = vmul.f32 %v457, %v507
    %v585 = vmul.f32 %v459, %v512
    %v586 = vmul.f32 %v461, %v517
    %v587 = vmul.f32 %v463, %v522
    %v588 = vmul.f32 %v465, %v527
    %v589 = vmul.f32 %v467, %v532
    %v590 = vmul.f32 %v469, %v537
    %v591 = vmul.f32 %v471, %v542
    %v592 = vmul.f32 %v473, %v547
    %v593 = vmul.f32 %v475, %v552
    %v594 = vmul.f32 %v477, %v557
    %v595 = vmul.f32 %v479, %v562
    %v596 = vmul.f32 %v481, %v567
    %v597 = vmul.f32 %v483, %v572
    %v598 = vmul.f32 %v485, %v577
    %v599 = vmul.f32 %v487, %v582
    %v600 = vadd.f32 %v584, %v585
    %v601 = vadd.f32 %v600, %v586
    %v602 = vadd.f32 %v601, %v587
    %v603 = vadd.f32 %v602, %v588
    %v604 = vadd.f32 %v603, %v589
    %v605 = vadd.f32 %v604, %v590
    %v606 = vadd.f32 %v605, %v591
    %v607 = vadd.f32 %v606, %v592
    %v608 = vadd.f32 %v607, %v593
    %v609 = vadd.f32 %v608, %v594
    %v610 = vadd.f32 %v609, %v595
    %v611 = vadd.f32 %v610, %v596
    %v612 = vadd.f32 %v611, %v597
    %v613 = vadd.f32 %v612, %v598
    %v614 = vadd.f32 %v613, %v599
    %v615 = vrot.slane %v614, 4
    %v616 = vadd.f32 %v614, %v615
    %v617 = vrot.slane %v616, 2
    %v618 = vadd.f32 %v616, %v617
    %v619 = vrot.slane %v618, 1
    %v620 = vadd.f32 %v618, %v619
    %s621 = sld [smem:[#allocation2]]
    %v622 = vstv %s621
    %v623 = vadd.f32 %v620, %v622
    %v624 = vxor.u32 %v623, 2147483648
    %v625 = vmul.f32 %v624, 1.442695
    %v626 = vpow.pop %v625
    %v627 = vadd.f32 %v626, 1.0
    %v628 = vrcp.pop %v627
    %v629 = vmul.f32 1.0, %v628
    %630 = vst [vmem:[#allocation3] sm:$0x1] %v629
    // Predicated region
    $region22: #{tpu_custom_call.1} parent=1 // pred_check
      _
    $region23: #{tpu_custom_call.1} parent=1 // pred_check_branch
      %632 = sbr.rel (0) target = $region25
    $region24: #{tpu_custom_call.1} parent=1 // pred_region
      %s634 = ssub.s32 16, 16
      %635 = vsyncadd [#allocation4], %s634
      %s637 = sshll.u32 [#allocation3], 4
      %s638 = int_to_ptr.vmem [resolvable:$true] %s637
      %640 = dma.vmem_to_hbm [thread:$0]  %s638, 16, %s5, [#allocation4]
    $region25: #{tpu_custom_call.1} parent=1 // pred_fallthru
      _
    // Predicated region
    $region26: #{tpu_custom_call.1} parent=1 // pred_check
      _
    $region27: #{tpu_custom_call.1} parent=1 // pred_check_branch
      %642 = sbr.rel (0) target = $region29
    $region28: #{tpu_custom_call.1} parent=1 // pred_region
      %643 = dma.done [#allocation4], 16
    $region29: #{tpu_custom_call.1} parent=1 // pred_fallthru
      _
    %644 = vsyncpa [#allocation4], 1

</llo_original>
